<compile_context>
chip_gen: v7x
topology: tpu7x:2x2x1
jax: 0.10.0
libtpu: 0.0.40
codegen_flags: <defaults>
</compile_context>

<pallas_src>
import math

import jax
import jax.numpy as jnp
from jax.experimental import pallas as pl
from jax.experimental.pallas import tpu as pltpu


_VMEM_LIMIT_BYTES = 48 * 1024 * 1024   # fits scoped VMEM on v5e / v6e / v7x


# ---------------------------------------------------------------------------
# Helpers
# ---------------------------------------------------------------------------
def _round_up(v, m):
    return (v + m - 1) // m * m


def _pad2d(a, rows, cols):
    r, c = a.shape
    return jnp.pad(a, ((0, rows - r), (0, cols - c)))


def _pick_tile(dim_pad, target):
    """Largest multiple of 128 that divides dim_pad and is <= target."""
    t = max(128, min(target, dim_pad))
    t -= t % 128
    while dim_pad % t:
        t -= 128
    return t


def _pick_row_tile(n_pad, target=256):
    """Row tile; keep >= 2 row tiles when possible (v7x dual TensorCore)."""
    tm = _pick_tile(n_pad, target)
    if n_pad // tm < 2 and n_pad >= 256:
        tm = _pick_tile(n_pad, tm // 2)
    return tm


# ---------------------------------------------------------------------------
# Pallas kernels
# ---------------------------------------------------------------------------
def _matmul_kernel(x_ref, w_ref, o_ref, acc_ref):
    """Tiled XW = x @ W; f32 VMEM accumulator, bf16 output."""
    k = pl.program_id(2)

    @pl.when(k == 0)
    def _():
        acc_ref[...] = jnp.zeros_like(acc_ref)

    acc_ref[...] += jnp.dot(x_ref[...], w_ref[...],
                            preferred_element_type=jnp.float32)

    @pl.when(k == pl.num_programs(2) - 1)
    def _():
        o_ref[...] = acc_ref[...].astype(o_ref.dtype)


def _gcn_agg_kernel(adj_ref, xw_ref, b_ref, o_ref, acc_ref):
    """Tiled aggregation: acc += adj[i,k] @ XW[k,j]; epilogue bias + ReLU.

    Grid = (N//tm, H//tn, N//tk); reduction axis k is last ("arbitrary").
    """
    k = pl.program_id(2)

    @pl.when(k == 0)
    def _():
        acc_ref[...] = jnp.zeros_like(acc_ref)

    acc_ref[...] += jnp.dot(adj_ref[...], xw_ref[...],
                            preferred_element_type=jnp.float32)

    @pl.when(k == pl.num_programs(2) - 1)
    def _():
        o_ref[...] = jnp.maximum(acc_ref[...] + b_ref[...], 0.0).astype(o_ref.dtype)


def _gcn_agg_linear_kernel(adj_ref, xw_ref, b_ref, wl_ref, bl_ref,
                           o_ref, acc_ref):
    """Last aggregation with the classifier fused into the k==last epilogue.

    Grid = (N//tm, N//tk); the full (padded) hidden dim lives in one tile so
    the (tm, H) @ (H, C) classifier matmul runs once per row tile.
    """
    k = pl.program_id(1)

    @pl.when(k == 0)
    def _():
        acc_ref[...] = jnp.zeros_like(acc_ref)

    acc_ref[...] += jnp.dot(adj_ref[...], xw_ref[...],
                            preferred_element_type=jnp.float32)

    @pl.when(k == pl.num_programs(1) - 1)
    def _():
        h = jnp.maximum(acc_ref[...] + b_ref[...], 0.0).astype(jnp.bfloat16)
        logits = jnp.dot(h, wl_ref[...], preferred_element_type=jnp.float32)
        o_ref[...] = (logits + bl_ref[...]).astype(o_ref.dtype)


# ---------------------------------------------------------------------------
# pallas_call wrappers (all arrays already padded/aligned; matmul operands bf16)
# ---------------------------------------------------------------------------
def matmul_bf16(x, w, *, tm, tn, tk):
    """x @ w with f32 accumulation, bf16 result.  x (M,K) bf16, w (K,N) bf16."""
    m, kdim = x.shape
    n = w.shape[1]
    grid = (m // tm, n // tn, kdim // tk)

    flops = 2 * m * kdim * n
    bytes_accessed = (x.size * 2 * grid[1]      # x re-read per output column tile
                      + w.size * 2 * grid[0]    # w re-read per output row tile
                      + m * n * 2)              # bf16 output

    return pl.pallas_call(
        _matmul_kernel,
        out_shape=jax.ShapeDtypeStruct((m, n), jnp.bfloat16),
        grid_spec=pltpu.PrefetchScalarGridSpec(
            num_scalar_prefetch=0,
            grid=grid,
            in_specs=[
                pl.BlockSpec((tm, tk), lambda i, j, k: (i, k)),
                pl.BlockSpec((tk, tn), lambda i, j, k: (k, j)),
            ],
            out_specs=pl.BlockSpec((tm, tn), lambda i, j, k: (i, j)),
            scratch_shapes=[pltpu.VMEM((tm, tn), jnp.float32)],
        ),
        compiler_params=pltpu.CompilerParams(
            dimension_semantics=("parallel", "parallel", "arbitrary"),
            vmem_limit_bytes=_VMEM_LIMIT_BYTES),
        cost_estimate=pl.CostEstimate(
            flops=flops, transcendentals=0, bytes_accessed=bytes_accessed),
    )(x, w)


def gcn_aggregate(adj, xw, b, *, tm, tn, tk):
    """relu(adj @ xw + b).  adj (Np,Np) bf16, xw (Np,Hp) bf16, b (1,Hp) f32.
    Returns (Np,Hp) bf16."""
    n_p = adj.shape[0]
    h_p = xw.shape[1]
    grid = (n_p // tm, h_p // tn, n_p // tk)

    flops = 2 * n_p * n_p * h_p
    bytes_accessed = (adj.size * 2 * grid[1]
                      + xw.size * 2 * grid[0]
                      + h_p * 4
                      + n_p * h_p * 2)

    return pl.pallas_call(
        _gcn_agg_kernel,
        out_shape=jax.ShapeDtypeStruct((n_p, h_p), jnp.bfloat16),
        grid_spec=pltpu.PrefetchScalarGridSpec(
            num_scalar_prefetch=0,
            grid=grid,
            in_specs=[
                pl.BlockSpec((tm, tk), lambda i, j, k: (i, k)),   # adj tile
                pl.BlockSpec((tk, tn), lambda i, j, k: (k, j)),   # XW tile
                pl.BlockSpec((1, tn), lambda i, j, k: (0, j)),    # bias slice
            ],
            out_specs=pl.BlockSpec((tm, tn), lambda i, j, k: (i, j)),
            scratch_shapes=[pltpu.VMEM((tm, tn), jnp.float32)],
        ),
        compiler_params=pltpu.CompilerParams(
            dimension_semantics=("parallel", "parallel", "arbitrary"),
            vmem_limit_bytes=_VMEM_LIMIT_BYTES),
        cost_estimate=pl.CostEstimate(
            flops=flops, transcendentals=0, bytes_accessed=bytes_accessed),
    )(adj, xw, b)


def gcn_aggregate_fused_linear(adj, xw, b, wl, bl, *, tm, tk):
    """relu(adj @ xw + b) @ wl + bl; classifier fused into the finalize step.
    Output padded to lane-dense Cp, f32."""
    n_p = adj.shape[0]
    h_p = xw.shape[1]
    c_p = wl.shape[1]
    grid = (n_p // tm, n_p // tk)

    flops = 2 * n_p * n_p * h_p + 2 * n_p * h_p * c_p
    bytes_accessed = (adj.size * 2
                      + xw.size * 2 * grid[0]
                      + wl.size * 2
                      + h_p * 4 + c_p * 4
                      + n_p * c_p * 4)

    return pl.pallas_call(
        _gcn_agg_linear_kernel,
        out_shape=jax.ShapeDtypeStruct((n_p, c_p), jnp.float32),
        grid_spec=pltpu.PrefetchScalarGridSpec(
            num_scalar_prefetch=0,
            grid=grid,
            in_specs=[
                pl.BlockSpec((tm, tk), lambda i, k: (i, k)),    # adj tile
                pl.BlockSpec((tk, h_p), lambda i, k: (k, 0)),   # XW rows for k
                pl.BlockSpec((1, h_p), lambda i, k: (0, 0)),    # bias (invariant)
                pl.BlockSpec((h_p, c_p), lambda i, k: (0, 0)),  # W_lin (invariant)
                pl.BlockSpec((1, c_p), lambda i, k: (0, 0)),    # b_lin (invariant)
            ],
            out_specs=pl.BlockSpec((tm, c_p), lambda i, k: (i, 0)),
            scratch_shapes=[pltpu.VMEM((tm, h_p), jnp.float32)],
        ),
        compiler_params=pltpu.CompilerParams(
            dimension_semantics=("parallel", "arbitrary"),
            vmem_limit_bytes=_VMEM_LIMIT_BYTES),
        cost_estimate=pl.CostEstimate(
            flops=flops, transcendentals=0, bytes_accessed=bytes_accessed),
    )(adj, xw, b, wl, bl)


# ---------------------------------------------------------------------------
# GCNBias model
# ---------------------------------------------------------------------------
def init_params(key, n_feat, n_hid, n_classes, n_layers):
    params = {"gcs": [], "linear": None}
    dims_in = [n_feat] + [n_hid] * (n_layers - 1)
    for l in range(n_layers):
        key, kw, kb = jax.random.split(key, 3)
        fan_in, fan_out = dims_in[l], n_hid
        stdv = 1.0 / math.sqrt(fan_out)  # GraphConv reset_parameters convention
        w = jax.random.uniform(kw, (fan_in, fan_out), jnp.float32, -stdv, stdv)
        b = jax.random.uniform(kb, (fan_out,), jnp.float32, -stdv, stdv)
        params["gcs"].append((w, b))
    key, kw, kb = jax.random.split(key, 3)
    bound = 1.0 / math.sqrt(n_hid)  # nn.Linear default init bounds
    w = jax.random.uniform(kw, (n_hid, n_classes), jnp.float32, -bound, bound)
    b = jax.random.uniform(kb, (n_classes,), jnp.float32, -bound, bound)
    params["linear"] = (w, b)
    return params


def gcn_bias_forward(params, x, adj, *, tm_target=256, tn_target=512, tk_target=512):
    """Forward pass of GCNBias (eval mode).  Pads dims to TPU-aligned multiples
    (zero padding is exact for the real rows/cols), precomputes XW per layer,
    runs the tiled aggregation kernels, then slices the result."""
    n, f = x.shape
    wl, bl = params["linear"]
    n_hid = params["gcs"][0][0].shape[1]
    n_classes = bl.shape[0]

    n_pad = _round_up(max(n, 1), 128)
    f_pad = _round_up(f, 128)
    h_pad = _round_up(n_hid, 128)
    c_pad = _round_up(n_classes, 128)

    tm = _pick_row_tile(n_pad, tm_target)
    tk = _pick_tile(n_pad, tk_target)
    tn = _pick_tile(h_pad, tn_target)

    adj_p = _pad2d(adj, n_pad, n_pad).astype(jnp.bfloat16)
    h = _pad2d(x, n_pad, f_pad).astype(jnp.bfloat16)

    n_gc = len(params["gcs"])
    for l, (w, b) in enumerate(params["gcs"]):
        in_pad = h.shape[1]
        w_p = _pad2d(w, in_pad, h_pad).astype(jnp.bfloat16)
        b_p = jnp.pad(b, (0, h_pad - b.shape[0])).reshape(1, h_pad).astype(jnp.float32)

        # XW precomputed once per layer (no per-row-tile recompute).
        tkf = _pick_tile(in_pad, tk_target)
        xw = matmul_bf16(h, w_p, tm=tm, tn=tn, tk=tkf)

        if l < n_gc - 1:
            h = gcn_aggregate(adj_p, xw, b_p, tm=tm, tn=tn, tk=tk)
            # TODO(synk): dropout is identity here (eval-mode semantics).
        else:
            wl_p = _pad2d(wl, h_pad, c_pad).astype(jnp.bfloat16)
            bl_p = jnp.pad(bl, (0, c_pad - n_classes)).reshape(1, c_pad).astype(jnp.float32)
            h = gcn_aggregate_fused_linear(adj_p, xw, b_p, wl_p, bl_p, tm=tm, tk=tk)
    return h[:n, :n_classes]


def reference_forward(params, x, adj):
    """Plain-JAX reference with the same bf16-operand / f32-accumulate casts."""
    adj_bf = adj.astype(jnp.bfloat16)
    h = x.astype(jnp.bfloat16)
    for (w, b) in params["gcs"]:
        xw = jnp.dot(h, w.astype(jnp.bfloat16), preferred_element_type=jnp.float32)
        axw = jnp.dot(adj_bf, xw.astype(jnp.bfloat16),
                      preferred_element_type=jnp.float32)
        h = jnp.maximum(axw + b, 0.0).astype(jnp.bfloat16)
    wl, bl = params["linear"]
    return jnp.dot(h, wl.astype(jnp.bfloat16),
                   preferred_element_type=jnp.float32) + bl


# ---------------------------------------------------------------------------
# Demo / smoke test
# ---------------------------------------------------------------------------
if __name__ == "__main__":
    # Small but tiling-exercising sizes (N padded 200->256 so the row axis has
    # 2 parallel tiles, F 96->128, classes 10->128 lane-dense then sliced).
    N_NODES, N_FEAT, N_HID, N_CLASSES, N_LAYERS = 200, 96, 128, 10, 2

    key = jax.random.PRNGKey(0)
    key, kx, ka = jax.random.split(key, 3)

    x = jax.random.normal(kx, (N_NODES, N_FEAT), jnp.float32)

    # symmetric, row-normalized adjacency with self loops (typical GCN input)
    a = (jax.random.uniform(ka, (N_NODES, N_NODES)) < 0.1).astype(jnp.float32)
    a = jnp.maximum(a, a.T) + jnp.eye(N_NODES, dtype=jnp.float32)
    adj = a / jnp.sum(a, axis=1, keepdims=True)

    params = init_params(key, N_FEAT, N_HID, N_CLASSES, N_LAYERS)

    out = gcn_bias_forward(params, x, adj)
    jax.block_until_ready(out)

    ref = reference_forward(params, x, adj)
    assert out.shape == (N_NODES, N_CLASSES), out.shape
    assert jnp.allclose(out, ref, atol=1e-2, rtol=1e-2), (
        float(jnp.max(jnp.abs(out - ref))))

    print("KERNEL_OK")
</pallas_src>

<mosaic_0001>
module attributes {stable_mosaic.version = 11 : i64} {
  func.func @_matmul_kernel(%arg0: i32, %arg1: i32, %arg2: i32, %arg3: memref<128x128xbf16, #tpu.memory_space<vmem>>, %arg4: memref<128x128xbf16, #tpu.memory_space<vmem>>, %arg5: memref<128x128xbf16, #tpu.memory_space<vmem>>, %arg6: memref<128x128xf32, #tpu.memory_space<vmem>>) attributes {dimension_semantics = [#tpu.dimension_semantics<parallel>, #tpu.dimension_semantics<parallel>, #tpu.dimension_semantics<arbitrary>], iteration_bounds = array<i64: 2, 1, 1>, scalar_prefetch = 0 : i64, scratch_operands = 1 : i64, tpu.core_type = #tpu.core_type<tc>, window_params = [{transform_indices = @transform_0, window_bounds = array<i64: 128, 128>}, {transform_indices = @transform_1, window_bounds = array<i64: 128, 128>}, {transform_indices = @transform_2, window_bounds = array<i64: 128, 128>}]} {
    %c0_i32 = arith.constant 0 : i32
    %0 = arith.cmpi eq, %arg2, %c0_i32 : i32
    %1 = arith.extui %0 : i1 to i32
    %c0_i32_0 = arith.constant 0 : i32
    %2 = arith.cmpi ne, %1, %c0_i32_0 : i32
    scf.if %2 {
      %cst_10 = arith.constant 0.000000e+00 : f32
      %12 = vector.broadcast %cst_10 : f32 to vector<128x128xf32>
      %c0_11 = arith.constant 0 : index
      %c0_12 = arith.constant 0 : index
      %13 = vector.load %arg6[%c0_11, %c0_12] : memref<128x128xf32, #tpu.memory_space<vmem>>, vector<128x128xf32>
      tpu.vector_store %arg6[%c0_11, %c0_12], %12 {strides = array<i32>} : memref<128x128xf32, #tpu.memory_space<vmem>>, vector<128x128xf32>,
    } else {
    }
    %c0 = arith.constant 0 : index
    %c0_1 = arith.constant 0 : index
    %3 = vector.load %arg6[%c0, %c0_1] : memref<128x128xf32, #tpu.memory_space<vmem>>, vector<128x128xf32>
    %c0_2 = arith.constant 0 : index
    %c0_3 = arith.constant 0 : index
    %4 = vector.load %arg3[%c0_2, %c0_3] : memref<128x128xbf16, #tpu.memory_space<vmem>>, vector<128x128xbf16>
    %c0_4 = arith.constant 0 : index
    %c0_5 = arith.constant 0 : index
    %5 = vector.load %arg4[%c0_4, %c0_5] : memref<128x128xbf16, #tpu.memory_space<vmem>>, vector<128x128xbf16>
    %cst = arith.constant dense<0.000000e+00> : vector<128x128xf32>
    %6 = tpu.matmul %4, %5, %cst {dimension_numbers = #tpu.dot_dimension_numbers<[1], [0], [0], [1], [0, 0, 1, 1], [], []>} : vector<128x128xbf16>, vector<128x128xbf16>, vector<128x128xf32> -> vector<128x128xf32>
    %7 = arith.addf %3, %6 : vector<128x128xf32>
    %c0_6 = arith.constant 0 : index
    %c0_7 = arith.constant 0 : index
    %8 = vector.load %arg6[%c0_6, %c0_7] : memref<128x128xf32, #tpu.memory_space<vmem>>, vector<128x128xf32>
    tpu.vector_store %arg6[%c0_6, %c0_7], %7 {strides = array<i32>} : memref<128x128xf32, #tpu.memory_space<vmem>>, vector<128x128xf32>,
    %c0_i32_8 = arith.constant 0 : i32
    %9 = arith.cmpi eq, %arg2, %c0_i32_8 : i32
    %10 = arith.extui %9 : i1 to i32
    %c0_i32_9 = arith.constant 0 : i32
    %11 = arith.cmpi ne, %10, %c0_i32_9 : i32
    scf.if %11 {
      %c0_10 = arith.constant 0 : index
      %c0_11 = arith.constant 0 : index
      %12 = vector.load %arg6[%c0_10, %c0_11] : memref<128x128xf32, #tpu.memory_space<vmem>>, vector<128x128xf32>
      %13 = arith.truncf %12 : vector<128x128xf32> to vector<128x128xbf16>
      %c0_12 = arith.constant 0 : index
      %c0_13 = arith.constant 0 : index
      %14 = vector.load %arg5[%c0_12, %c0_13] : memref<128x128xbf16, #tpu.memory_space<vmem>>, vector<128x128xbf16>
      tpu.vector_store %arg5[%c0_12, %c0_13], %13 {strides = array<i32>} : memref<128x128xbf16, #tpu.memory_space<vmem>>, vector<128x128xbf16>,
    } else {
    }
    return
  }
  func.func @transform_0(%arg0: i32, %arg1: i32, %arg2: i32) -> (i32, i32) {
    %c0_i32 = arith.constant 0 : i32
    return %arg0, %arg2 : i32, i32
  }
  func.func @transform_1(%arg0: i32, %arg1: i32, %arg2: i32) -> (i32, i32) {
    %c0_i32 = arith.constant 0 : i32
    return %arg2, %arg1 : i32, i32
  }
  func.func @transform_2(%arg0: i32, %arg1: i32, %arg2: i32) -> (i32, i32) {
    %c0_i32 = arith.constant 0 : i32
    return %arg0, %arg1 : i32, i32
  }
}

</mosaic_0001>

<llo_original>
// kernel: tpu_custom_call.1
$region0: #{tpu_custom_call.1}
  #allocation0 [shape = 'u32[]', space=smem, size = 0x4, offset = 0x4, fixed_abs, tag = 'smem constant byte address 0x4 - core index']
  #allocation1 [shape = 'u32[144,128]{1,0:T(1,128)}', space=vmem, size = 0x12000, scoped, tag = 'internal scratch']
  #allocation2 [shape = 'f32[128,128]{1,0:T(8,128)}', space=vmem, size = 0x10000, scoped, tag = 'scratch operand']
  %s0 = inlined_call_operand.hbm [shape: bf16[256,128], index: 0, kind: input, shape index: {}]
  %s1 = inlined_call_operand.hbm [shape: bf16[128,128], index: 1, kind: input, shape index: {}]
  %s2 = inlined_call_operand.hbm [shape: bf16[256,128], index: 2, kind: output, shape index: {}]
  %s3 = sld [smem:[#allocation0]]
  $region57: #{tpu_custom_call.1} parent=0
    _
  %s5 = ssub.s32 1, %s3
  %s6 = scalar_select 0, %s5, %s3
  $region1: #{tpu_custom_call.1} parent=0
    #allocation3 [shape = 'u8[65536]{0}', space=vmem, size = 0x10000, scoped, tag = 'input window, operand 0']
    #allocation4 [shape = 's32[2]{0}', space=sflag, size = 0x8, scoped, tag = 'scoped memory for tpu_custom_call.1']
    #allocation5 [shape = 's32[2]{0}', space=sflag, size = 0x8, scoped, tag = 'scoped memory for tpu_custom_call.1']
    #allocation6 [shape = 'u8[32768]{0}', space=vmem, size = 0x8000, scoped, tag = 'input window, operand 1, single buffered']
    #allocation7 [shape = 's32[1]{0}', space=sflag, size = 0x4, scoped, tag = 'scoped memory for tpu_custom_call.1']
    #allocation8 [shape = 'u8[65536]{0}', space=vmem, size = 0x10000, scoped, tag = 'output window, operand 0']
    %7 = vsyncpa [#allocation4], 0
    %s8 = scalar_lea.sflag [#allocation4], 1
    %9 = vsyncpa %s8, 0
    %10 = vsyncpa [#allocation7], 0
    %11 = vsyncpa [#allocation5], 0
    %s12 = scalar_lea.sflag [#allocation5], 1
    %13 = vsyncpa %s12, 0
    loop: start=0, step=1, limit=4
    $region2: #{tpu_custom_call.1} parent=1 // loop_pre_header
      _
    $region3: #{tpu_custom_call.1} parent=1 // loop_header
      %s15 = sphi 0, %s19
      %p16 = scmp.ge.s32.totalorder %s15, 4
      %s22 = sphi 0, %s41
      %s23 = sphi 0, %s37
      %s24 = sphi 0, %s33
      %s25 = sphi 0, %s22
      %s26 = sphi 0, %s23
      %s27 = sphi 0, %s24
      %s28 = sphi 0, %s25
      %s29 = sphi 0, %s26
      %s30 = sphi 0, %s27
      %s46 = sphi 0, %s48
      %s49 = sphi 0, %s46
      %s50 = sphi 0, %s49
      %s66 = sphi 0, %s50
      %s74 = sphi 0, %s76
      %s77 = sphi 0, %s74
      %s78 = sphi 0, %s77
      %s94 = sphi 0, %s78
      %s102 = sphi 0, %s104
      %s105 = sphi 0, %s102
      %s106 = sphi 0, %s105
      %s122 = sphi 0, %s106
    $region4: #{tpu_custom_call.1} parent=1 // loop_header_branch
      %18 = sbr.rel (%p16) target = $region8
    $region5: #{tpu_custom_call.1} parent=1 // loop_body
      %s20 = ssub.s32 %s15, 1
      %s21 = ssub.s32 %s15, 2
      %s31 = sadd.s32 1, %s24
      %p32 = scmp.ge.s32.totalorder %s31, 1
      %s33 = scalar_select %p32, 0, %s31
      %s34 = sadd.s32 1, %s23
      %s35 = scalar_select %p32, %s34, %s23
      %p36 = scmp.ge.s32.totalorder %s35, 1
      %s37 = scalar_select %p36, 0, %s35
      %s38 = sadd.s32 1, %s22
      %s39 = scalar_select %p36, %s38, %s22
      %p40 = scmp.ge.s32.totalorder %s39, 2
      %s41 = scalar_select %p40, 0, %s39
      %s42 = ssub.s32 %s22, %s41
      %s43 = ssub.s32 %s24, %s33
      %s44 = sor.u32 %s42, %s43
      %p45 = scmp.eq.s32.totalorder %s44, 0
      %s47 = sadd.s32 %s46, 1
      %s48 = scalar_select %p45, %s46, %s47
      %p51 = pneg %p45
      %p52 = scmp.eq.s32.totalorder %s15, 1
      %p53 = por %p51, %p52
      %p54 = scmp.ne.s32.totalorder %s46, %s49
      %p55 = scmp.eq.s32.totalorder %s15, 0
      %p56 = por %p54, %p55
      %p57 = scmp.ne.s32.totalorder %s46, %s49
      %p58 = scmp.eq.s32.totalorder %s20, 1
      %p59 = por %p57, %p58
      %p60 = scmp.ne.s32.totalorder %s49, %s50
      %p61 = scmp.eq.s32.totalorder %s20, 0
      %p62 = por %p60, %p61
      %p63 = scmp.ne.s32.totalorder %s49, %s50
      %p64 = scmp.eq.s32.totalorder %s21, 1
      %p65 = por %p63, %p64
      %p67 = scmp.ne.s32.totalorder %s50, %s66
      %p68 = scmp.eq.s32.totalorder %s21, 0
      %p69 = por %p67, %p68
      %s70 = ssub.s32 %s24, %s33
      %s71 = ssub.s32 %s23, %s37
      %s72 = sor.u32 %s70, %s71
      %p73 = scmp.eq.s32.totalorder %s72, 0
      %s75 = sadd.s32 %s74, 1
      %s76 = scalar_select %p73, %s74, %s75
      %p79 = pneg %p73
      %p80 = scmp.eq.s32.totalorder %s15, 1
      %p81 = por %p79, %p80
      %p82 = scmp.ne.s32.totalorder %s74, %s77
      %p83 = scmp.eq.s32.totalorder %s15, 0
      %p84 = por %p82, %p83
      %p85 = scmp.ne.s32.totalorder %s74, %s77
      %p86 = scmp.eq.s32.totalorder %s20, 1
      %p87 = por %p85, %p86
      %p88 = scmp.ne.s32.totalorder %s77, %s78
      %p89 = scmp.eq.s32.totalorder %s20, 0
      %p90 = por %p88, %p89
      %p91 = scmp.ne.s32.totalorder %s77, %s78
      %p92 = scmp.eq.s32.totalorder %s21, 1
      %p93 = por %p91, %p92
      %p95 = scmp.ne.s32.totalorder %s78, %s94
      %p96 = scmp.eq.s32.totalorder %s21, 0
      %p97 = por %p95, %p96
      %s98 = ssub.s32 %s22, %s41
      %s99 = ssub.s32 %s23, %s37
      %s100 = sor.u32 %s98, %s99
      %p101 = scmp.eq.s32.totalorder %s100, 0
      %s103 = sadd.s32 %s102, 1
      %s104 = scalar_select %p101, %s102, %s103
      %p107 = pneg %p101
      %p108 = scmp.eq.s32.totalorder %s15, 1
      %p109 = por %p107, %p108
      %p110 = scmp.ne.s32.totalorder %s102, %s105
      %p111 = scmp.eq.s32.totalorder %s15, 0
      %p112 = por %p110, %p111
      %p113 = scmp.ne.s32.totalorder %s102, %s105
      %p114 = scmp.eq.s32.totalorder %s20, 1
      %p115 = por %p113, %p114
      %p116 = scmp.ne.s32.totalorder %s105, %s106
      %p117 = scmp.eq.s32.totalorder %s20, 0
      %p118 = por %p116, %p117
      %p119 = scmp.ne.s32.totalorder %s105, %s106
      %p120 = scmp.eq.s32.totalorder %s21, 1
      %p121 = por %p119, %p120
      %p123 = scmp.ne.s32.totalorder %s106, %s122
      %p124 = scmp.eq.s32.totalorder %s21, 0
      %p125 = por %p123, %p124
      %p126 = scmp.le.s32.totalorder 1, %s15
      %p127 = scmp.lt.s32.totalorder %s15, 3
      %p128 = pnand %p126, %p127
      %p129 = pneg %p128
      // Predicated region
      $region9: #{tpu_custom_call.1} parent=5 // pred_check
        _
      $region10: #{tpu_custom_call.1} parent=5 // pred_check_branch
        %131 = sbr.rel (%p128) target = $region12
      $region11: #{tpu_custom_call.1} parent=5 // pred_region
        %s132 = ssub.s32 %s15, 1
        // Predicated region
        $region13: #{tpu_custom_call.1} parent=11 // pred_check
          %p133 = pneg %p90
        $region14: #{tpu_custom_call.1} parent=11 // pred_check_branch
          %135 = sbr.rel (%p133) target = $region16
        $region15: #{tpu_custom_call.1} parent=11 // pred_region
          %s136 = smul.u32 16, %s27
          %s138 = ssub.s32 1024, 1024
          %139 = vsyncadd [#allocation7], %s138
          %s140 = sadd.s32 %s26, %s136
          %s141 = smul.addr %s140, 64
          %s142 = scalar_lea.hbm %s1, %s141
          %s143 = sshll.u32 [#allocation6], 4
          %s144 = int_to_ptr.vmem [resolvable:$true] %s143
          %149 = dma.hbm_to_vmem [thread:$0]  %s142, 1024, %s144, [#allocation7], 64, 64, 4
        $region16: #{tpu_custom_call.1} parent=11 // pred_fallthru
          _
      $region12: #{tpu_custom_call.1} parent=5 // pred_fallthru
        _
      %p150 = scmp.lt.s32.totalorder %s15, 2
      // Predicated region
      $region17: #{tpu_custom_call.1} parent=5 // pred_check
        %p151 = pneg %p150
      $region18: #{tpu_custom_call.1} parent=5 // pred_check_branch
        %153 = sbr.rel (%p151) target = $region20
      $region19: #{tpu_custom_call.1} parent=5 // pred_region
        // Predicated region
        $region21: #{tpu_custom_call.1} parent=19 // pred_check
          %p154 = pneg %p56
        $region22: #{tpu_custom_call.1} parent=19 // pred_check_branch
          %156 = sbr.rel (%p154) target = $region24
        $region23: #{tpu_custom_call.1} parent=19 // pred_region
          %s157 = sand.u32 %s46, 1
          %s158 = scalar_lea.sflag [#allocation4], %s157
          %s159 = sand.u32 %s46, 1
          %s160 = smul.addr %s159, 64
          %s161 = scalar_lea.vmem [#allocation3], %s160
          %s162 = smul.u32 16, %s22
          %s164 = ssub.s32 1024, 1024
          %165 = vsyncadd %s158, %s164
          %s166 = sadd.s32 %s24, %s162
          %s167 = smul.addr %s166, 64
          %s168 = scalar_lea.hbm %s0, %s167
          %s169 = sshll.u32 %s161, 4
          %s170 = int_to_ptr.vmem [resolvable:$true] %s169
          %175 = dma.hbm_to_vmem [thread:$0]  %s168, 1024, %s170, %s158, 64, 64, 4
        $region24: #{tpu_custom_call.1} parent=19 // pred_fallthru
          _
      $region20: #{tpu_custom_call.1} parent=5 // pred_fallthru
        _
      %p176 = scmp.le.s32.totalorder 1, %s15
      %p177 = scmp.lt.s32.totalorder %s15, 3
      %p178 = pnand %p176, %p177
      %p179 = pneg %p178
      // Predicated region
      $region25: #{tpu_custom_call.1} parent=5 // pred_check
        _
      $region26: #{tpu_custom_call.1} parent=5 // pred_check_branch
        %181 = sbr.rel (%p178) target = $region28
      $region27: #{tpu_custom_call.1} parent=5 // pred_region
        %s182 = ssub.s32 %s15, 1
        %s183 = sand.u32 %s49, 1
        %s184 = scalar_lea.sflag [#allocation4], %s183
        %s185 = sand.u32 %s49, 1
        %s186 = smul.addr %s185, 64
        %s187 = scalar_lea.vmem [#allocation3], %s186
        // Predicated region
        $region29: #{tpu_custom_call.1} parent=27 // pred_check
          %p188 = pneg %p62
        $region30: #{tpu_custom_call.1} parent=27 // pred_check_branch
          %190 = sbr.rel (%p188) target = $region32
        $region31: #{tpu_custom_call.1} parent=27 // pred_region
          %191 = dma.done %s184, 1024
        $region32: #{tpu_custom_call.1} parent=27 // pred_fallthru
          _
        // Predicated region
        $region33: #{tpu_custom_call.1} parent=27 // pred_check
          %p192 = pneg %p90
        $region34: #{tpu_custom_call.1} parent=27 // pred_check_branch
          %194 = sbr.rel (%p192) target = $region36
        $region35: #{tpu_custom_call.1} parent=27 // pred_region
          %195 = dma.done [#allocation7], 1024
        $region36: #{tpu_custom_call.1} parent=27 // pred_fallthru
          _
        %s196 = sand.u32 %s49, 1
        %s197 = scalar_lea.sflag [#allocation4], %s196
        %s198 = sand.u32 %s49, 1
        %s199 = smul.addr %s198, 64
        %s200 = scalar_lea.vmem [#allocation3], %s199
        %p201 = pneg %p62
        %p202 = pneg %p59
        %p203 = pneg %p90
        %p204 = pneg %p87
        %p205 = pneg %p118
        %p206 = pneg %p115
        %s207 = sand.u32 %s105, 1
        %s208 = scalar_lea.sflag [#allocation5], %s207
        %s209 = sand.u32 %s105, 1
        %s210 = smul.addr %s209, 64
        %s211 = scalar_lea.vmem [#allocation8], %s210
        %s212 = smul.u32 16, %s25
        %s213 = smul.u32 16, %s27
        %s214 = smul.u32 16, %s25
        %p216 = scmp.eq.s32.totalorder %s27, 0
        // Predicated region
        $region37: #{tpu_custom_call.1} parent=27 // pred_check
          %p217 = pneg %p216
        $region38: #{tpu_custom_call.1} parent=27 // pred_check_branch
          %219 = sbr.rel (%p217) target = $region40
        $region39: #{tpu_custom_call.1} parent=27 // pred_region
          %220 = vst [vmem:[#allocation2] sm:$0xff] 0.0
          %221 = vst [vmem:[#allocation2 + $0x8] sm:$0xff] 0.0
          %222 = vst [vmem:[#allocation2 + $0x10] sm:$0xff] 0.0
          %223 = vst [vmem:[#allocation2 + $0x18] sm:$0xff] 0.0
          %224 = vst [vmem:[#allocation2 + $0x20] sm:$0xff] 0.0
          %225 = vst [vmem:[#allocation2 + $0x28] sm:$0xff] 0.0
          %226 = vst [vmem:[#allocation2 + $0x30] sm:$0xff] 0.0
          %227 = vst [vmem:[#allocation2 + $0x38] sm:$0xff] 0.0
          %228 = vst [vmem:[#allocation2 + $0x40] sm:$0xff] 0.0
          %229 = vst [vmem:[#allocation2 + $0x48] sm:$0xff] 0.0
          %230 = vst [vmem:[#allocation2 + $0x50] sm:$0xff] 0.0
          %231 = vst [vmem:[#allocation2 + $0x58] sm:$0xff] 0.0
          %232 = vst [vmem:[#allocation2 + $0x60] sm:$0xff] 0.0
          %233 = vst [vmem:[#allocation2 + $0x68] sm:$0xff] 0.0
          %234 = vst [vmem:[#allocation2 + $0x70] sm:$0xff] 0.0
          %235 = vst [vmem:[#allocation2 + $0x78] sm:$0xff] 0.0
        $region40: #{tpu_custom_call.1} parent=27 // pred_fallthru
          _
        %v236 = vld [vmem:[#allocation2] sm:$0xff]
        %v237 = vld [vmem:[#allocation2 + $0x8] sm:$0xff]
        %v238 = vld [vmem:[#allocation2 + $0x10] sm:$0xff]
        %v239 = vld [vmem:[#allocation2 + $0x18] sm:$0xff]
        %v240 = vld [vmem:[#allocation2 + $0x20] sm:$0xff]
        %v241 = vld [vmem:[#allocation2 + $0x28] sm:$0xff]
        %v242 = vld [vmem:[#allocation2 + $0x30] sm:$0xff]
        %v243 = vld [vmem:[#allocation2 + $0x38] sm:$0xff]
        %v244 = vld [vmem:[#allocation2 + $0x40] sm:$0xff]
        %v245 = vld [vmem:[#allocation2 + $0x48] sm:$0xff]
        %v246 = vld [vmem:[#allocation2 + $0x50] sm:$0xff]
        %v247 = vld [vmem:[#allocation2 + $0x58] sm:$0xff]
        %v248 = vld [vmem:[#allocation2 + $0x60] sm:$0xff]
        %v249 = vld [vmem:[#allocation2 + $0x68] sm:$0xff]
        %v250 = vld [vmem:[#allocation2 + $0x70] sm:$0xff]
        %v251 = vld [vmem:[#allocation2 + $0x78] sm:$0xff]
        %v252 = vld [vmem:[%s187] sm:$0xf]
        %v253 = vld [vmem:[%s187 + $0x4] sm:$0xf]
        %v254 = vld [vmem:[%s187 + $0x8] sm:$0xf]
        %v255 = vld [vmem:[%s187 + $0xc] sm:$0xf]
        %v256 = vld [vmem:[%s187 + $0x10] sm:$0xf]
        %v257 = vld [vmem:[%s187 + $0x14] sm:$0xf]
        %v258 = vld [vmem:[%s187 + $0x18] sm:$0xf]
        %v259 = vld [vmem:[%s187 + $0x1c] sm:$0xf]
        %v260 = vld [vmem:[%s187 + $0x20] sm:$0xf]
        %v261 = vld [vmem:[%s187 + $0x24] sm:$0xf]
        %v262 = vld [vmem:[%s187 + $0x28] sm:$0xf]
        %v263 = vld [vmem:[%s187 + $0x2c] sm:$0xf]
        %v264 = vld [vmem:[%s187 + $0x30] sm:$0xf]
        %v265 = vld [vmem:[%s187 + $0x34] sm:$0xf]
        %v266 = vld [vmem:[%s187 + $0x38] sm:$0xf]
        %v267 = vld [vmem:[%s187 + $0x3c] sm:$0xf]
        %v268 = vld [vmem:[#allocation6] sm:$0xf]
        %v269 = vld [vmem:[#allocation6 + $0x4] sm:$0xf]
        %v270 = vld [vmem:[#allocation6 + $0x8] sm:$0xf]
        %v271 = vld [vmem:[#allocation6 + $0xc] sm:$0xf]
        %v272 = vld [vmem:[#allocation6 + $0x10] sm:$0xf]
        %v273 = vld [vmem:[#allocation6 + $0x14] sm:$0xf]
        %v274 = vld [vmem:[#allocation6 + $0x18] sm:$0xf]
        %v275 = vld [vmem:[#allocation6 + $0x1c] sm:$0xf]
        %v276 = vld [vmem:[#allocation6 + $0x20] sm:$0xf]
        %v277 = vld [vmem:[#allocation6 + $0x24] sm:$0xf]
        %v278 = vld [vmem:[#allocation6 + $0x28] sm:$0xf]
        %v279 = vld [vmem:[#allocation6 + $0x2c] sm:$0xf]
        %v280 = vld [vmem:[#allocation6 + $0x30] sm:$0xf]
        %v281 = vld [vmem:[#allocation6 + $0x34] sm:$0xf]
        %v282 = vld [vmem:[#allocation6 + $0x38] sm:$0xf]
        %v283 = vld [vmem:[#allocation6 + $0x3c] sm:$0xf]
        %v300 = vunpack.c.l.b16 %v252
        %v301 = vunpack.c.l.b16 %v253
        %v302 = vunpack.c.l.b16 %v254
        %v303 = vunpack.c.l.b16 %v255
        %v304 = vunpack.c.l.b16 %v256
        %v305 = vunpack.c.l.b16 %v257
        %v306 = vunpack.c.l.b16 %v258
        %v307 = vunpack.c.l.b16 %v259
        %v308 = vunpack.c.l.b16 %v260
        %v309 = vunpack.c.l.b16 %v261
        %v310 = vunpack.c.l.b16 %v262
        %v311 = vunpack.c.l.b16 %v263
        %v312 = vunpack.c.l.b16 %v264
        %v313 = vunpack.c.l.b16 %v265
        %v314 = vunpack.c.l.b16 %v266
        %v315 = vunpack.c.l.b16 %v267
        %v316 = vpack.c.b16 %v301, %v300
        %v317 = vpack.c.b16 %v303, %v302
        %v318 = vpack.c.b16 %v305, %v304
        %v319 = vpack.c.b16 %v307, %v306
        %v320 = vpack.c.b16 %v309, %v308
        %v321 = vpack.c.b16 %v311, %v310
        %v322 = vpack.c.b16 %v313, %v312
        %v323 = vpack.c.b16 %v315, %v314
        %v348 = vunpack.c.l.b16 %v268
        %v349 = vunpack.c.l.b16 %v269
        %v350 = vunpack.c.l.b16 %v270
        %v351 = vunpack.c.l.b16 %v271
        %v352 = vunpack.c.l.b16 %v272
        %v353 = vunpack.c.l.b16 %v273
        %v354 = vunpack.c.l.b16 %v274
        %v355 = vunpack.c.l.b16 %v275
        %v356 = vunpack.c.l.b16 %v276
        %v357 = vunpack.c.l.b16 %v277
        %v358 = vunpack.c.l.b16 %v278
        %v359 = vunpack.c.l.b16 %v279
        %v360 = vunpack.c.l.b16 %v280
        %v361 = vunpack.c.l.b16 %v281
        %v362 = vunpack.c.l.b16 %v282
        %v363 = vunpack.c.l.b16 %v283
        %v364 = vpack.c.b16 %v349, %v348
        %v365 = vpack.c.b16 %v351, %v350
        %v366 = vpack.c.b16 %v353, %v352
        %v367 = vpack.c.b16 %v355, %v354
        %v368 = vpack.c.b16 %v357, %v356
        %v369 = vpack.c.b16 %v359, %v358
        %v370 = vpack.c.b16 %v361, %v360
        %v371 = vpack.c.b16 %v363, %v362
        %380 = vmatprep.subr.bf16.mxu0 0
        %381 = vmatpush1.bf16.msra.mxu0 %v364
        %382 = vmatprep.subr.bf16.mxu0 0
        %383 = vmatpush1.bf16.msra.mxu0 %v365
        %384 = vmatprep.subr.bf16.mxu0 0
        %385 = vmatpush1.bf16.msra.mxu0 %v366
        %386 = vmatprep.subr.bf16.mxu0 0
        %387 = vmatpush1.bf16.msra.mxu0 %v367
        %388 = vmatprep.subr.bf16.mxu0 0
        %389 = vmatpush1.bf16.msra.mxu0 %v368
        %390 = vmatprep.subr.bf16.mxu0 0
        %391 = vmatpush1.bf16.msra.mxu0 %v369
        %392 = vmatprep.subr.bf16.mxu0 0
        %393 = vmatpush1.bf16.msra.mxu0 %v370
        %394 = vmatprep.subr.bf16.mxu0 0
        %395 = vmatpush1.bf16.msra.mxu0 %v371
        %396 = vmatprep.subr.bf16.mxu0 0
        %397 = vmatpush1.bf16.msra.mxu0 0
        %398 = vmatprep.subr.bf16.mxu0 0
        %399 = vmatpush1.bf16.msra.mxu0 0
        %400 = vmatprep.subr.bf16.mxu0 0
        %401 = vmatpush1.bf16.msra.mxu0 0
        %402 = vmatprep.subr.bf16.mxu0 0
        %403 = vmatpush1.bf16.msra.mxu0 0
        %404 = vmatprep.subr.bf16.mxu0 0
        %405 = vmatpush1.bf16.msra.mxu0 0
        %406 = vmatprep.subr.bf16.mxu0 0
        %407 = vmatpush1.bf16.msra.mxu0 0
        %408 = vmatprep.subr.bf16.mxu0 0
        %409 = vmatpush1.bf16.msra.mxu0 0
        %410 = vmatprep.subr.bf16.mxu0 0
        %411 = vmatpush1.bf16.msra.mxu0 0
        %412 = vmatprep.mubr.bf16.mxu0 0
        %413 = vmatmul.mubr.bf16.gmra.mrb[0].mxu0 %v316
        %v414 = vpop.f32.mrb[0].mxu0
        %v415 = vadd.f32 0.0, %v414
        %v416 = vpop.f32.mrb[0].mxu0
        %v417 = vpop.f32.mrb[0].mxu0
        %v418 = vadd.f32 0.0, %v417
        %v419 = vpop.f32.mrb[0].mxu0
        %420 = vmatprep.mubr.bf16.mxu0 0
        %421 = vmatmul.mubr.bf16.gmra.mrb[0].mxu0 %v317
        %v422 = vpop.f32.mrb[0].mxu0
        %v423 = vadd.f32 0.0, %v422
        %v424 = vpop.f32.mrb[0].mxu0
        %v425 = vpop.f32.mrb[0].mxu0
        %v426 = vadd.f32 0.0, %v425
        %v427 = vpop.f32.mrb[0].mxu0
        %428 = vmatprep.mubr.bf16.mxu0 0
        %429 = vmatmul.mubr.bf16.gmra.mrb[0].mxu0 %v318
        %v430 = vpop.f32.mrb[0].mxu0
        %v431 = vadd.f32 0.0, %v430
        %v432 = vpop.f32.mrb[0].mxu0
        %v433 = vpop.f32.mrb[0].mxu0
        %v434 = vadd.f32 0.0, %v433
        %v435 = vpop.f32.mrb[0].mxu0
        %436 = vmatprep.mubr.bf16.mxu0 0
        %437 = vmatmul.mubr.bf16.gmra.mrb[0].mxu0 %v319
        %v438 = vpop.f32.mrb[0].mxu0
        %v439 = vadd.f32 0.0, %v438
        %v440 = vpop.f32.mrb[0].mxu0
        %v441 = vpop.f32.mrb[0].mxu0
        %v442 = vadd.f32 0.0, %v441
        %v443 = vpop.f32.mrb[0].mxu0
        %444 = vmatprep.mubr.bf16.mxu0 0
        %445 = vmatmul.mubr.bf16.gmra.mrb[0].mxu0 %v320
        %v446 = vpop.f32.mrb[0].mxu0
        %v447 = vadd.f32 0.0, %v446
        %v448 = vpop.f32.mrb[0].mxu0
        %v449 = vpop.f32.mrb[0].mxu0
        %v450 = vadd.f32 0.0, %v449
        %v451 = vpop.f32.mrb[0].mxu0
        %452 = vmatprep.mubr.bf16.mxu0 0
        %453 = vmatmul.mubr.bf16.gmra.mrb[0].mxu0 %v321
        %v454 = vpop.f32.mrb[0].mxu0
        %v455 = vadd.f32 0.0, %v454
        %v456 = vpop.f32.mrb[0].mxu0
        %v457 = vpop.f32.mrb[0].mxu0
        %v458 = vadd.f32 0.0, %v457
        %v459 = vpop.f32.mrb[0].mxu0
        %460 = vmatprep.mubr.bf16.mxu0 0
        %461 = vmatmul.mubr.bf16.gmra.mrb[0].mxu0 %v322
        %v462 = vpop.f32.mrb[0].mxu0
        %v463 = vadd.f32 0.0, %v462
        %v464 = vpop.f32.mrb[0].mxu0
        %v465 = vpop.f32.mrb[0].mxu0
        %v466 = vadd.f32 0.0, %v465
        %v467 = vpop.f32.mrb[0].mxu0
        %468 = vmatprep.mubr.bf16.mxu0 0
        %469 = vmatmul.mubr.bf16.gmra.mrb[0].mxu0 %v323
        %v470 = vpop.f32.mrb[0].mxu0
        %v471 = vadd.f32 0.0, %v470
        %v472 = vpop.f32.mrb[0].mxu0
        %v473 = vpop.f32.mrb[0].mxu0
        %v474 = vadd.f32 0.0, %v473
        %v475 = vpop.f32.mrb[0].mxu0
        %476 = vdwg.mxu0
        %v477 = vadd.f32 %v236, %v415
        %v478 = vadd.f32 %v237, %v418
        %v479 = vadd.f32 %v238, %v423
        %v480 = vadd.f32 %v239, %v426
        %v481 = vadd.f32 %v240, %v431
        %v482 = vadd.f32 %v241, %v434
        %v483 = vadd.f32 %v242, %v439
        %v484 = vadd.f32 %v243, %v442
        %v485 = vadd.f32 %v244, %v447
        %v486 = vadd.f32 %v245, %v450
        %v487 = vadd.f32 %v246, %v455
        %v488 = vadd.f32 %v247, %v458
        %v489 = vadd.f32 %v248, %v463
        %v490 = vadd.f32 %v249, %v466
        %v491 = vadd.f32 %v250, %v471
        %v492 = vadd.f32 %v251, %v474
        %493 = vst [vmem:[#allocation2] sm:$0xff] %v477
        %494 = vst [vmem:[#allocation2 + $0x8] sm:$0xff] %v478
        %495 = vst [vmem:[#allocation2 + $0x10] sm:$0xff] %v479
        %496 = vst [vmem:[#allocation2 + $0x18] sm:$0xff] %v480
        %497 = vst [vmem:[#allocation2 + $0x20] sm:$0xff] %v481
        %498 = vst [vmem:[#allocation2 + $0x28] sm:$0xff] %v482
        %499 = vst [vmem:[#allocation2 + $0x30] sm:$0xff] %v483
        %500 = vst [vmem:[#allocation2 + $0x38] sm:$0xff] %v484
        %501 = vst [vmem:[#allocation2 + $0x40] sm:$0xff] %v485
        %502 = vst [vmem:[#allocation2 + $0x48] sm:$0xff] %v486
        %503 = vst [vmem:[#allocation2 + $0x50] sm:$0xff] %v487
        %504 = vst [vmem:[#allocation2 + $0x58] sm:$0xff] %v488
        %505 = vst [vmem:[#allocation2 + $0x60] sm:$0xff] %v489
        %506 = vst [vmem:[#allocation2 + $0x68] sm:$0xff] %v490
        %507 = vst [vmem:[#allocation2 + $0x70] sm:$0xff] %v491
        %508 = vst [vmem:[#allocation2 + $0x78] sm:$0xff] %v492
        // Predicated region
        $region41: #{tpu_custom_call.1} parent=27 // pred_check
          %p509 = pneg %p216
        $region42: #{tpu_custom_call.1} parent=27 // pred_check_branch
          %511 = sbr.rel (%p509) target = $region44
        $region43: #{tpu_custom_call.1} parent=27 // pred_region
          %v512 = vld [vmem:[#allocation2] sm:$0xff]
          %v513 = vld [vmem:[#allocation2 + $0x8] sm:$0xff]
          %v514 = vld [vmem:[#allocation2 + $0x10] sm:$0xff]
          %v515 = vld [vmem:[#allocation2 + $0x18] sm:$0xff]
          %v516 = vld [vmem:[#allocation2 + $0x20] sm:$0xff]
          %v517 = vld [vmem:[#allocation2 + $0x28] sm:$0xff]
          %v518 = vld [vmem:[#allocation2 + $0x30] sm:$0xff]
          %v519 = vld [vmem:[#allocation2 + $0x38] sm:$0xff]
          %v520 = vld [vmem:[#allocation2 + $0x40] sm:$0xff]
          %v521 = vld [vmem:[#allocation2 + $0x48] sm:$0xff]
          %v522 = vld [vmem:[#allocation2 + $0x50] sm:$0xff]
          %v523 = vld [vmem:[#allocation2 + $0x58] sm:$0xff]
          %v524 = vld [vmem:[#allocation2 + $0x60] sm:$0xff]
          %v525 = vld [vmem:[#allocation2 + $0x68] sm:$0xff]
          %v526 = vld [vmem:[#allocation2 + $0x70] sm:$0xff]
          %v527 = vld [vmem:[#allocation2 + $0x78] sm:$0xff]
          %v528 = vpack.c.bf16 %v513, %v512
          %v529 = vpack.c.bf16 %v515, %v514
          %v530 = vpack.c.bf16 %v517, %v516
          %v531 = vpack.c.bf16 %v519, %v518
          %v532 = vpack.c.bf16 %v521, %v520
          %v533 = vpack.c.bf16 %v523, %v522
          %v534 = vpack.c.bf16 %v525, %v524
          %v535 = vpack.c.bf16 %v527, %v526
          %v544 = vunpack.c.l.b16 %v528
          %v545 = vunpack.c.h.b16 %v528
          %v546 = vunpack.c.l.b16 %v529
          %v547 = vunpack.c.h.b16 %v529
          %v548 = vunpack.c.l.b16 %v530
          %v549 = vunpack.c.h.b16 %v530
          %v550 = vunpack.c.l.b16 %v531
          %v551 = vunpack.c.h.b16 %v531
          %v552 = vunpack.c.l.b16 %v532
          %v553 = vunpack.c.h.b16 %v532
          %v554 = vunpack.c.l.b16 %v533
          %v555 = vunpack.c.h.b16 %v533
          %v556 = vunpack.c.l.b16 %v534
          %v557 = vunpack.c.h.b16 %v534
          %v558 = vunpack.c.l.b16 %v535
          %v559 = vunpack.c.h.b16 %v535
          %v560 = vpack.c.b16 %v544, %v544
          %v561 = vpack.c.b16 %v545, %v545
          %v562 = vpack.c.b16 %v546, %v546
          %v563 = vpack.c.b16 %v547, %v547
          %v564 = vpack.c.b16 %v548, %v548
          %v565 = vpack.c.b16 %v549, %v549
          %v566 = vpack.c.b16 %v550, %v550
          %v567 = vpack.c.b16 %v551, %v551
          %v568 = vpack.c.b16 %v552, %v552
          %v569 = vpack.c.b16 %v553, %v553
          %v570 = vpack.c.b16 %v554, %v554
          %v571 = vpack.c.b16 %v555, %v555
          %v572 = vpack.c.b16 %v556, %v556
          %v573 = vpack.c.b16 %v557, %v557
          %v574 = vpack.c.b16 %v558, %v558
          %v575 = vpack.c.b16 %v559, %v559
          %592 = vst [vmem:[%s211] sm:$0xf] %v560
          %593 = vst [vmem:[%s211 + $0x4] sm:$0xf] %v561
          %594 = vst [vmem:[%s211 + $0x8] sm:$0xf] %v562
          %595 = vst [vmem:[%s211 + $0xc] sm:$0xf] %v563
          %596 = vst [vmem:[%s211 + $0x10] sm:$0xf] %v564
          %597 = vst [vmem:[%s211 + $0x14] sm:$0xf] %v565
          %598 = vst [vmem:[%s211 + $0x18] sm:$0xf] %v566
          %599 = vst [vmem:[%s211 + $0x1c] sm:$0xf] %v567
          %600 = vst [vmem:[%s211 + $0x20] sm:$0xf] %v568
          %601 = vst [vmem:[%s211 + $0x24] sm:$0xf] %v569
          %602 = vst [vmem:[%s211 + $0x28] sm:$0xf] %v570
          %603 = vst [vmem:[%s211 + $0x2c] sm:$0xf] %v571
          %604 = vst [vmem:[%s211 + $0x30] sm:$0xf] %v572
          %605 = vst [vmem:[%s211 + $0x34] sm:$0xf] %v573
          %606 = vst [vmem:[%s211 + $0x38] sm:$0xf] %v574
          %607 = vst [vmem:[%s211 + $0x3c] sm:$0xf] %v575
        $region44: #{tpu_custom_call.1} parent=27 // pred_fallthru
          _
        %s608 = sand.u32 %s105, 1
        %s609 = scalar_lea.sflag [#allocation5], %s608
        %s610 = sand.u32 %s105, 1
        %s611 = smul.addr %s610, 64
        %s612 = scalar_lea.vmem [#allocation8], %s611
        // Predicated region
        $region45: #{tpu_custom_call.1} parent=27 // pred_check
          %p613 = pneg %p115
        $region46: #{tpu_custom_call.1} parent=27 // pred_check_branch
          %615 = sbr.rel (%p613) target = $region48
        $region47: #{tpu_custom_call.1} parent=27 // pred_region
          %s616 = smul.u32 16, %s25
          %s618 = ssub.s32 1024, 1024
          %619 = vsyncadd %s609, %s618
          %s620 = sadd.s32 %s26, %s616
          %s621 = smul.addr %s620, 64
          %s622 = scalar_lea.hbm %s2, %s621
          %s623 = sshll.u32 %s612, 4
          %s624 = int_to_ptr.vmem [resolvable:$true] %s623
          %629 = dma.vmem_to_hbm [thread:$0]  %s624, 1024, %s622, %s609, 64, 64, 4
        $region48: #{tpu_custom_call.1} parent=27 // pred_fallthru
          _
      $region28: #{tpu_custom_call.1} parent=5 // pred_fallthru
        _
      %p630 = scmp.le.s32.totalorder 2, %s15
      // Predicated region
      $region49: #{tpu_custom_call.1} parent=5 // pred_check
        %p631 = pneg %p630
      $region50: #{tpu_custom_call.1} parent=5 // pred_check_branch
        %633 = sbr.rel (%p631) target = $region52
      $region51: #{tpu_custom_call.1} parent=5 // pred_region
        %s634 = ssub.s32 %s15, 2
        // Predicated region
        $region53: #{tpu_custom_call.1} parent=51 // pred_check
          %p635 = pneg %p121
        $region54: #{tpu_custom_call.1} parent=51 // pred_check_branch
          %637 = sbr.rel (%p635) target = $region56
        $region55: #{tpu_custom_call.1} parent=51 // pred_region
          %s638 = sand.u32 %s106, 1
          %s639 = scalar_lea.sflag [#allocation5], %s638
          %s640 = sand.u32 %s106, 1
          %s641 = smul.addr %s640, 64
          %s642 = scalar_lea.vmem [#allocation8], %s641
          %643 = dma.done %s639, 1024
        $region56: #{tpu_custom_call.1} parent=51 // pred_fallthru
          _
      $region52: #{tpu_custom_call.1} parent=5 // pred_fallthru
        _
    $region6: #{tpu_custom_call.1} parent=1 // loop_footer
      %s19 = sadd.s32 1, %s15
    $region7: #{tpu_custom_call.1} parent=1 // loop_footer_branch
      %14 = sbr.rel target = $region3
    $region8: #{tpu_custom_call.1} parent=1 // loop_exit
      _
    %644 = vsyncpa [#allocation4], 1
    %s645 = scalar_lea.sflag [#allocation4], 1
    %646 = vsyncpa %s645, 1
    %647 = vsyncpa [#allocation7], 1
    %648 = vsyncpa [#allocation5], 1
    %s649 = scalar_lea.sflag [#allocation5], 1
    %650 = vsyncpa %s649, 1

</llo_original>
